<compile_context>
chip_gen: v5e
topology: v5e:2x2
jax: 0.10.0
libtpu: 0.0.40
codegen_flags: <defaults>
</compile_context>

<pallas_src>
import jax
import jax.numpy as jnp
from jax.experimental import pallas as pl
from jax.experimental.pallas import tpu as pltpu


# ---------------------------------------------------------------------------
# Kernel body
# ---------------------------------------------------------------------------
def megrez_moe_mlp_kernel(x_ref, wgu_ref, wd_ref, o_ref, acc_ref):
    """One (token-tile i, intermediate-chunk k) grid step.

    x_ref  : [tm, H]     wgu_ref: [H, 2*ti]  (columns = [gate_k | up_k])
    wd_ref : [ti, H]     o_ref  : [tm, H]    acc_ref: [tm, H] f32 scratch
    """
    k = pl.program_id(1)

    @pl.when(k == 0)
    def _():
        acc_ref[...] = jnp.zeros_like(acc_ref)

    ti = wd_ref.shape[0]
    # Single fused gate+up matmul: one MXU pass of width 2*ti, f32 accumulate.
    gu = jnp.dot(x_ref[...], wgu_ref[...], preferred_element_type=jnp.float32)
    gate = gu[:, :ti]   # static slices; ti is a multiple of 128 in the normal
    up = gu[:, ti:]     # path, so both are lane-aligned (no relayout)
    # SiluAndMul in f32 (logistic on EUP, muls on VPU).
    act = (gate * jax.lax.logistic(gate)) * up
    # Intentional precision difference vs a pure-f32 reference: act is cast to
    # the weight dtype (bf16) so the down-projection runs on the MXU.
    acc_ref[...] += jnp.dot(act.astype(wd_ref.dtype), wd_ref[...],
                            preferred_element_type=jnp.float32)

    @pl.when(k == pl.num_programs(1) - 1)
    def _():
        o_ref[...] = acc_ref[...].astype(o_ref.dtype)


# ---------------------------------------------------------------------------
# Tiling / chip helpers
# ---------------------------------------------------------------------------
def _pick_tile(full, want, aligns):
    """Largest divisor of `full` that is <= `want` and a multiple of the best
    alignment in `aligns`; falls back to the full extent (always legal)."""
    if full <= want:
        return full
    for align in aligns:
        if full % align == 0:
            t = max(align, (min(want, full) // align) * align)
            while full % t != 0:
                t -= align
            return t
    return full


def _chip_params():
    """Per-generation tile targets and VMEM request caps."""
    kind = ""
    try:
        kind = (getattr(jax.devices()[0], "device_kind", "") or "").lower()
    except Exception:
        pass
    if "v7" in kind:
        # 64 MiB physical VMEM, 2 TensorCores: smaller tiles, never request
        # the whole physical VMEM, keep >= 2 token tiles on the parallel axis.
        p = dict(tm=512, ti=256, cap=52 * 2**20, min_token_tiles=2, v7x=True)
    elif "v6" in kind:
        # 128 MiB VMEM, ridge ~700 flop/byte -> large token tile to hit MXU.
        p = dict(tm=1024, ti=512, cap=100 * 2**20, min_token_tiles=1, v7x=False)
    elif "v5" in kind and ("lite" in kind or "v5e" in kind):
        # v5e is already compute bound at tm=256; bigger tiles buy nothing.
        p = dict(tm=256, ti=512, cap=96 * 2**20, min_token_tiles=1, v7x=False)
    else:
        p = dict(tm=512, ti=512, cap=64 * 2**20, min_token_tiles=1, v7x=False)
    try:  # refine the cap from the actual hardware if the query is available
        phys = getattr(pltpu.get_tpu_info(), "vmem_capacity_bytes", None)
        if phys:
            p["cap"] = min(p["cap"], int(phys * 0.8))
    except Exception:
        pass
    return p


# ---------------------------------------------------------------------------
# Wrapper
# ---------------------------------------------------------------------------
def megrez_moe_mlp(x, w_gate, w_up, w_down, *, tm=None, ti=None):
    """MegrezMoeMLP forward: silu(x @ w_gate) * (x @ w_up) @ w_down.

    x: [T, H], w_gate: [H, I], w_up: [H, I], w_down: [I, H] -> [T, H].
    """
    T, H = x.shape
    I = w_gate.shape[1]
    assert w_gate.shape == (H, I)
    assert w_up.shape == (H, I)
    assert w_down.shape == (I, H)

    p = _chip_params()
    tm_aligns = (256, 128, 16, 8)   # prefer MXU-width / bf16-packing multiples
    ti_aligns = (256, 128)          # lane-dense chunks, >= 512 B DMA bursts

    tm = _pick_tile(T, tm if tm is not None else p["tm"], tm_aligns)
    ti = _pick_tile(I, ti if ti is not None else p["ti"], ti_aligns)

    # v7x: keep the parallel token axis at >= 2 tiles so both TensorCores work.
    if p["min_token_tiles"] > 1 and T // tm < p["min_token_tiles"] and T >= 32:
        tm = _pick_tile(T, max(16, T // p["min_token_tiles"]), tm_aligns)

    isz_x = jnp.dtype(x.dtype).itemsize
    isz_w = jnp.dtype(w_gate.dtype).itemsize
    io_bufs = 1 if p["v7x"] else 2  # x/out single-buffered on v7x (Buffered(1))

    def vmem_est(tm_, ti_):
        return (io_bufs * tm_ * H * isz_x          # x tiles
                + io_bufs * tm_ * H * isz_x        # out tiles
                + 2 * H * (2 * ti_) * isz_w        # fused gate|up weight tiles
                + 2 * ti_ * H * isz_w              # down weight tiles
                + tm_ * H * 4                      # f32 accumulator
                + tm_ * 2 * ti_ * 4                # f32 gate|up matmul result
                + tm_ * ti_ * 4                    # f32 act
                + tm_ * ti_ * isz_w)               # act cast for down matmul

    # Shrink tiles (graceful, divisor-preserving) until the 1.25x-headroom
    # estimate fits under the per-chip VMEM request cap.
    while 1.25 * vmem_est(tm, ti) > p["cap"]:
        if tm > 64:
            new_tm = _pick_tile(T, tm // 2, tm_aligns)
            if new_tm < tm:
                tm = new_tm
                continue
        if ti > 256:
            new_ti = _pick_tile(I, ti // 2, ti_aligns)
            if new_ti < ti:
                ti = new_ti
                continue
        break

    vmem_limit = int(min(max(1.25 * vmem_est(tm, ti), 32 * 2**20), p["cap"]))

    n_tok, n_int = T // tm, I // ti
    grid = (n_tok, n_int)

    # Fuse gate/up into one chunk-interleaved weight [H, 2I]: chunk k holds
    # [gate_k | up_k] adjacently, so a (H, 2*ti) block at column-block k is a
    # single contiguous-per-row DMA and splits with lane-aligned slices.
    # (In a real model this layout prep happens once at weight-load time.)
    w_gu = jnp.concatenate(
        [w_gate.reshape(H, n_int, ti), w_up.reshape(H, n_int, ti)],
        axis=2).reshape(H, 2 * I)

    def io_spec():
        if p["v7x"] and hasattr(pl, "Buffered"):
            # x/out block index only changes at token-tile boundaries; single
            # buffering reclaims VMEM on v7x (64 MiB physical) for a bigger tm.
            return pl.BlockSpec((tm, H), lambda i, k: (i, 0),
                                pipeline_mode=pl.Buffered(1))
        return pl.BlockSpec((tm, H), lambda i, k: (i, 0))

    in_specs = [
        io_spec(),                                        # x tile
        pl.BlockSpec((H, 2 * ti), lambda i, k: (0, k)),   # fused gate|up chunk
        pl.BlockSpec((ti, H), lambda i, k: (k, 0)),       # down chunk
    ]
    out_specs = io_spec()

    cost = pl.CostEstimate(
        flops=6 * T * H * I,                              # gate + up + down
        transcendentals=T * I,                            # logistic in silu
        bytes_accessed=int(
            x.size * isz_x                                # x read once per tile row
            + n_tok * (w_gu.size + w_down.size) * isz_w   # weights re-streamed T/tm times
            + T * H * isz_x))                             # output write

    return pl.pallas_call(
        megrez_moe_mlp_kernel,
        out_shape=jax.ShapeDtypeStruct((T, H), x.dtype),
        grid_spec=pltpu.PrefetchScalarGridSpec(
            num_scalar_prefetch=0,
            grid=grid,
            in_specs=in_specs,
            out_specs=out_specs,
            scratch_shapes=[pltpu.VMEM((tm, H), jnp.float32)],
        ),
        compiler_params=pltpu.CompilerParams(
            dimension_semantics=("parallel", "arbitrary"),
            vmem_limit_bytes=vmem_limit),
        cost_estimate=cost,
    )(x, w_gu, w_down)


def reference_mlp(x, w_gate, w_up, w_down):
    xf = x.astype(jnp.float32)
    gate = xf @ w_gate.astype(jnp.float32)
    up = xf @ w_up.astype(jnp.float32)
    return (jax.nn.silu(gate) * up) @ w_down.astype(jnp.float32)


if __name__ == "__main__":
    # Small, lane/sublane-aligned shapes consistent with the module:
    # 32 tokens, hidden=128, intermediate=512.  Explicit tm=16 / ti=256 gives a
    # (2, 2) grid so both the parallel token axis and the intermediate
    # reduction/accumulator path are exercised; tm=16 respects bf16 sublane
    # packing, ti=256 keeps the gate/up split lane-aligned.
    T, H, I = 32, 128, 512
    key = jax.random.PRNGKey(0)
    kx, kg, ku, kd = jax.random.split(key, 4)

    # bf16 activations/weights (MXU-native), f32 accumulation inside the kernel.
    x = jax.random.normal(kx, (T, H), dtype=jnp.float32).astype(jnp.bfloat16)
    w_gate = (jax.random.normal(kg, (H, I), dtype=jnp.float32) * 0.05).astype(jnp.bfloat16)
    w_up = (jax.random.normal(ku, (H, I), dtype=jnp.float32) * 0.05).astype(jnp.bfloat16)
    w_down = (jax.random.normal(kd, (I, H), dtype=jnp.float32) * 0.05).astype(jnp.bfloat16)

    out = megrez_moe_mlp(x, w_gate, w_up, w_down, tm=16, ti=256)
    out = jax.block_until_ready(out)

    ref = reference_mlp(x, w_gate, w_up, w_down)
    assert out.shape == (T, H)
    err = jnp.max(jnp.abs(out.astype(jnp.float32) - ref))
    assert err < 2e-2, f"mismatch vs reference, max abs err = {err}"
    print("KERNEL_OK")
</pallas_src>

<mosaic_0001>
module attributes {stable_mosaic.version = 11 : i64} {
  func.func @megrez_moe_mlp_kernel(%arg0: i32, %arg1: i32, %arg2: memref<16x128xbf16, #tpu.memory_space<vmem>>, %arg3: memref<128x512xbf16, #tpu.memory_space<vmem>>, %arg4: memref<256x128xbf16, #tpu.memory_space<vmem>>, %arg5: memref<16x128xbf16, #tpu.memory_space<vmem>>, %arg6: memref<16x128xf32, #tpu.memory_space<vmem>>) attributes {dimension_semantics = [#tpu.dimension_semantics<parallel>, #tpu.dimension_semantics<arbitrary>], iteration_bounds = array<i64: 2, 2>, scalar_prefetch = 0 : i64, scratch_operands = 1 : i64, tpu.core_type = #tpu.core_type<tc>, window_params = [{transform_indices = @transform_0, window_bounds = array<i64: 16, 128>}, {transform_indices = @transform_1, window_bounds = array<i64: 128, 512>}, {transform_indices = @transform_2, window_bounds = array<i64: 256, 128>}, {transform_indices = @transform_3, window_bounds = array<i64: 16, 128>}]} {
    %c0_i32 = arith.constant 0 : i32
    %0 = arith.cmpi eq, %arg1, %c0_i32 : i32
    %1 = arith.extui %0 : i1 to i32
    %c0_i32_0 = arith.constant 0 : i32
    %2 = arith.cmpi ne, %1, %c0_i32_0 : i32
    scf.if %2 {
      %cst_13 = arith.constant 0.000000e+00 : f32
      %24 = vector.broadcast %cst_13 : f32 to vector<16x128xf32>
      %c0_14 = arith.constant 0 : index
      %c0_15 = arith.constant 0 : index
      %25 = vector.load %arg6[%c0_14, %c0_15] : memref<16x128xf32, #tpu.memory_space<vmem>>, vector<16x128xf32>
      tpu.vector_store %arg6[%c0_14, %c0_15], %24 {strides = array<i32>} : memref<16x128xf32, #tpu.memory_space<vmem>>, vector<16x128xf32>,
    } else {
    }
    %c0 = arith.constant 0 : index
    %c0_1 = arith.constant 0 : index
    %3 = vector.load %arg2[%c0, %c0_1] : memref<16x128xbf16, #tpu.memory_space<vmem>>, vector<16x128xbf16>
    %c0_2 = arith.constant 0 : index
    %c0_3 = arith.constant 0 : index
    %4 = vector.load %arg3[%c0_2, %c0_3] : memref<128x512xbf16, #tpu.memory_space<vmem>>, vector<128x512xbf16>
    %cst = arith.constant dense<0.000000e+00> : vector<16x512xf32>
    %5 = tpu.matmul %3, %4, %cst {dimension_numbers = #tpu.dot_dimension_numbers<[1], [0], [0], [1], [0, 0, 1, 1], [], []>} : vector<16x128xbf16>, vector<128x512xbf16>, vector<16x512xf32> -> vector<16x512xf32>
    %6 = vector.extract_strided_slice %5 {offsets = [0, 0], sizes = [16, 256], strides = [1, 1]} : vector<16x512xf32> to vector<16x256xf32>
    %7 = vector.extract_strided_slice %5 {offsets = [0, 256], sizes = [16, 256], strides = [1, 1]} : vector<16x512xf32> to vector<16x256xf32>
    %8 = arith.negf %6 : vector<16x256xf32>
    %9 = math.exp %8 : vector<16x256xf32>
    %cst_4 = arith.constant 1.000000e+00 : f32
    %10 = vector.broadcast %cst_4 : f32 to vector<16x256xf32>
    %11 = arith.addf %10, %9 : vector<16x256xf32>
    %12 = arith.divf %10, %11 : vector<16x256xf32>
    %13 = arith.mulf %6, %12 : vector<16x256xf32>
    %14 = arith.mulf %13, %7 : vector<16x256xf32>
    %c0_5 = arith.constant 0 : index
    %c0_6 = arith.constant 0 : index
    %15 = vector.load %arg6[%c0_5, %c0_6] : memref<16x128xf32, #tpu.memory_space<vmem>>, vector<16x128xf32>
    %16 = arith.truncf %14 : vector<16x256xf32> to vector<16x256xbf16>
    %c0_7 = arith.constant 0 : index
    %c0_8 = arith.constant 0 : index
    %17 = vector.load %arg4[%c0_7, %c0_8] : memref<256x128xbf16, #tpu.memory_space<vmem>>, vector<256x128xbf16>
    %cst_9 = arith.constant dense<0.000000e+00> : vector<16x128xf32>
    %18 = tpu.matmul %16, %17, %cst_9 {dimension_numbers = #tpu.dot_dimension_numbers<[1], [0], [0], [1], [0, 0, 1, 1], [], []>} : vector<16x256xbf16>, vector<256x128xbf16>, vector<16x128xf32> -> vector<16x128xf32>
    %19 = arith.addf %15, %18 : vector<16x128xf32>
    %c0_10 = arith.constant 0 : index
    %c0_11 = arith.constant 0 : index
    %20 = vector.load %arg6[%c0_10, %c0_11] : memref<16x128xf32, #tpu.memory_space<vmem>>, vector<16x128xf32>
    tpu.vector_store %arg6[%c0_10, %c0_11], %19 {strides = array<i32>} : memref<16x128xf32, #tpu.memory_space<vmem>>, vector<16x128xf32>,
    %c1_i32 = arith.constant 1 : i32
    %21 = arith.cmpi eq, %arg1, %c1_i32 : i32
    %22 = arith.extui %21 : i1 to i32
    %c0_i32_12 = arith.constant 0 : i32
    %23 = arith.cmpi ne, %22, %c0_i32_12 : i32
    scf.if %23 {
      %c0_13 = arith.constant 0 : index
      %c0_14 = arith.constant 0 : index
      %24 = vector.load %arg6[%c0_13, %c0_14] : memref<16x128xf32, #tpu.memory_space<vmem>>, vector<16x128xf32>
      %25 = arith.truncf %24 : vector<16x128xf32> to vector<16x128xbf16>
      %c0_15 = arith.constant 0 : index
      %c0_16 = arith.constant 0 : index
      %26 = vector.load %arg5[%c0_15, %c0_16] : memref<16x128xbf16, #tpu.memory_space<vmem>>, vector<16x128xbf16>
      tpu.vector_store %arg5[%c0_15, %c0_16], %25 {strides = array<i32>} : memref<16x128xbf16, #tpu.memory_space<vmem>>, vector<16x128xbf16>,
    } else {
    }
    return
  }
  func.func @transform_0(%arg0: i32, %arg1: i32) -> (i32, i32) {
    %c0_i32 = arith.constant 0 : i32
    %c0_i32_0 = arith.constant 0 : i32
    return %arg0, %c0_i32 : i32, i32
  }
  func.func @transform_1(%arg0: i32, %arg1: i32) -> (i32, i32) {
    %c0_i32 = arith.constant 0 : i32
    %c0_i32_0 = arith.constant 0 : i32
    return %c0_i32, %arg1 : i32, i32
  }
  func.func @transform_2(%arg0: i32, %arg1: i32) -> (i32, i32) {
    %c0_i32 = arith.constant 0 : i32
    %c0_i32_0 = arith.constant 0 : i32
    return %arg1, %c0_i32 : i32, i32
  }
  func.func @transform_3(%arg0: i32, %arg1: i32) -> (i32, i32) {
    %c0_i32 = arith.constant 0 : i32
    %c0_i32_0 = arith.constant 0 : i32
    return %arg0, %c0_i32 : i32, i32
  }
}

</mosaic_0001>

<llo_original>
// kernel: tpu_custom_call.1
$region0: #{tpu_custom_call.1}
  #allocation0 [shape = 'u32[]', space=smem, size = 0x4, offset = 0x4, fixed_abs, tag = 'smem constant byte address 0x4 - core index']
  #allocation1 [shape = 'u32[72,128]{1,0:T(1,128)}', space=vmem, size = 0x9000, scoped, tag = 'internal scratch']
  #allocation2 [shape = 'f32[16,128]{1,0:T(8,128)}', space=vmem, size = 0x2000, scoped, tag = 'scratch operand']
  %s0 = inlined_call_operand.hbm [shape: bf16[32,128], index: 0, kind: input, shape index: {}]
  %s1 = inlined_call_operand.hbm [shape: bf16[128,1024], index: 1, kind: input, shape index: {}]
  %s2 = inlined_call_operand.hbm [shape: bf16[512,128], index: 2, kind: input, shape index: {}]
  %s3 = inlined_call_operand.hbm [shape: bf16[32,128], index: 3, kind: output, shape index: {}]
  %s4 = sld [smem:[#allocation0]]
  $region65: #{tpu_custom_call.1} parent=0
    _
  %s6 = ssub.s32 1, %s4
  %s7 = scalar_select 0, %s6, %s4
  $region1: #{tpu_custom_call.1} parent=0
    #allocation3 [shape = 'u8[8192]{0}', space=vmem, size = 0x2000, scoped, tag = 'input window, operand 0']
    #allocation4 [shape = 's32[2]{0}', space=sflag, size = 0x8, scoped, tag = 'scoped memory for tpu_custom_call.1']
    #allocation5 [shape = 's32[2]{0}', space=sflag, size = 0x8, scoped, tag = 'scoped memory for tpu_custom_call.1']
    #allocation6 [shape = 'u8[262144]{0}', space=vmem, size = 0x40000, scoped, tag = 'input window, operand 1']
    #allocation7 [shape = 's32[2]{0}', space=sflag, size = 0x8, scoped, tag = 'scoped memory for tpu_custom_call.1']
    #allocation8 [shape = 'u8[131072]{0}', space=vmem, size = 0x20000, scoped, tag = 'input window, operand 2']
    #allocation9 [shape = 'u8[8192]{0}', space=vmem, size = 0x2000, scoped, tag = 'output window, operand 0']
    %8 = vsyncpa [#allocation4], 0
    %s9 = scalar_lea.sflag [#allocation4], 1
    %10 = vsyncpa %s9, 0
    %11 = vsyncpa [#allocation7], 0
    %s12 = scalar_lea.sflag [#allocation7], 1
    %13 = vsyncpa %s12, 0
    %14 = vsyncpa [#allocation5], 0
    %s15 = scalar_lea.sflag [#allocation5], 1
    %16 = vsyncpa %s15, 0
    loop: start=0, step=1, limit=6
    $region2: #{tpu_custom_call.1} parent=1 // loop_pre_header
      _
    $region3: #{tpu_custom_call.1} parent=1 // loop_header
      %s18 = sphi 0, %s22
      %p19 = scmp.ge.s32.totalorder %s18, 6
      %s25 = sphi 0, %s37
      %s26 = sphi 0, %s33
      %s27 = sphi 0, %s25
      %s28 = sphi 0, %s26
      %s29 = sphi 0, %s27
      %s30 = sphi 0, %s28
      %s40 = sphi 0, %s42
      %s43 = sphi 0, %s40
      %s44 = sphi 0, %s43
      %s60 = sphi 0, %s44
      %s66 = sphi 0, %s68
      %s69 = sphi 0, %s66
      %s70 = sphi 0, %s69
      %s86 = sphi 0, %s70
      %s92 = sphi 0, %s94
      %s95 = sphi 0, %s92
      %s96 = sphi 0, %s95
      %s112 = sphi 0, %s96
      %s118 = sphi 0, %s120
      %s121 = sphi 0, %s118
      %s122 = sphi 0, %s121
      %s138 = sphi 0, %s122
    $region4: #{tpu_custom_call.1} parent=1 // loop_header_branch
      %21 = sbr.rel (%p19) target = $region8
    $region5: #{tpu_custom_call.1} parent=1 // loop_body
      %s23 = ssub.s32 %s18, 1
      %s24 = ssub.s32 %s18, 2
      %s31 = sadd.s32 1, %s26
      %p32 = scmp.ge.s32.totalorder %s31, 2
      %s33 = scalar_select %p32, 0, %s31
      %s34 = sadd.s32 1, %s25
      %s35 = scalar_select %p32, %s34, %s25
      %p36 = scmp.ge.s32.totalorder %s35, 2
      %s37 = scalar_select %p36, 0, %s35
      %s38 = ssub.s32 %s25, %s37
      %p39 = scmp.eq.s32.totalorder %s38, 0
      %s41 = sadd.s32 %s40, 1
      %s42 = scalar_select %p39, %s40, %s41
      %p45 = pneg %p39
      %p46 = scmp.eq.s32.totalorder %s18, 3
      %p47 = por %p45, %p46
      %p48 = scmp.ne.s32.totalorder %s40, %s43
      %p49 = scmp.eq.s32.totalorder %s18, 0
      %p50 = por %p48, %p49
      %p51 = scmp.ne.s32.totalorder %s40, %s43
      %p52 = scmp.eq.s32.totalorder %s23, 3
      %p53 = por %p51, %p52
      %p54 = scmp.ne.s32.totalorder %s43, %s44
      %p55 = scmp.eq.s32.totalorder %s23, 0
      %p56 = por %p54, %p55
      %p57 = scmp.ne.s32.totalorder %s43, %s44
      %p58 = scmp.eq.s32.totalorder %s24, 3
      %p59 = por %p57, %p58
      %p61 = scmp.ne.s32.totalorder %s44, %s60
      %p62 = scmp.eq.s32.totalorder %s24, 0
      %p63 = por %p61, %p62
      %s64 = ssub.s32 %s26, %s33
      %p65 = scmp.eq.s32.totalorder %s64, 0
      %s67 = sadd.s32 %s66, 1
      %s68 = scalar_select %p65, %s66, %s67
      %p71 = pneg %p65
      %p72 = scmp.eq.s32.totalorder %s18, 3
      %p73 = por %p71, %p72
      %p74 = scmp.ne.s32.totalorder %s66, %s69
      %p75 = scmp.eq.s32.totalorder %s18, 0
      %p76 = por %p74, %p75
      %p77 = scmp.ne.s32.totalorder %s66, %s69
      %p78 = scmp.eq.s32.totalorder %s23, 3
      %p79 = por %p77, %p78
      %p80 = scmp.ne.s32.totalorder %s69, %s70
      %p81 = scmp.eq.s32.totalorder %s23, 0
      %p82 = por %p80, %p81
      %p83 = scmp.ne.s32.totalorder %s69, %s70
      %p84 = scmp.eq.s32.totalorder %s24, 3
      %p85 = por %p83, %p84
      %p87 = scmp.ne.s32.totalorder %s70, %s86
      %p88 = scmp.eq.s32.totalorder %s24, 0
      %p89 = por %p87, %p88
      %s90 = ssub.s32 %s26, %s33
      %p91 = scmp.eq.s32.totalorder %s90, 0
      %s93 = sadd.s32 %s92, 1
      %s94 = scalar_select %p91, %s92, %s93
      %p97 = pneg %p91
      %p98 = scmp.eq.s32.totalorder %s18, 3
      %p99 = por %p97, %p98
      %p100 = scmp.ne.s32.totalorder %s92, %s95
      %p101 = scmp.eq.s32.totalorder %s18, 0
      %p102 = por %p100, %p101
      %p103 = scmp.ne.s32.totalorder %s92, %s95
      %p104 = scmp.eq.s32.totalorder %s23, 3
      %p105 = por %p103, %p104
      %p106 = scmp.ne.s32.totalorder %s95, %s96
      %p107 = scmp.eq.s32.totalorder %s23, 0
      %p108 = por %p106, %p107
      %p109 = scmp.ne.s32.totalorder %s95, %s96
      %p110 = scmp.eq.s32.totalorder %s24, 3
      %p111 = por %p109, %p110
      %p113 = scmp.ne.s32.totalorder %s96, %s112
      %p114 = scmp.eq.s32.totalorder %s24, 0
      %p115 = por %p113, %p114
      %s116 = ssub.s32 %s25, %s37
      %p117 = scmp.eq.s32.totalorder %s116, 0
      %s119 = sadd.s32 %s118, 1
      %s120 = scalar_select %p117, %s118, %s119
      %p123 = pneg %p117
      %p124 = scmp.eq.s32.totalorder %s18, 3
      %p125 = por %p123, %p124
      %p126 = scmp.ne.s32.totalorder %s118, %s121
      %p127 = scmp.eq.s32.totalorder %s18, 0
      %p128 = por %p126, %p127
      %p129 = scmp.ne.s32.totalorder %s118, %s121
      %p130 = scmp.eq.s32.totalorder %s23, 3
      %p131 = por %p129, %p130
      %p132 = scmp.ne.s32.totalorder %s121, %s122
      %p133 = scmp.eq.s32.totalorder %s23, 0
      %p134 = por %p132, %p133
      %p135 = scmp.ne.s32.totalorder %s121, %s122
      %p136 = scmp.eq.s32.totalorder %s24, 3
      %p137 = por %p135, %p136
      %p139 = scmp.ne.s32.totalorder %s122, %s138
      %p140 = scmp.eq.s32.totalorder %s24, 0
      %p141 = por %p139, %p140
      %p142 = scmp.le.s32.totalorder 1, %s18
      %p143 = scmp.lt.s32.totalorder %s18, 5
      %p144 = pnand %p142, %p143
      %p145 = pneg %p144
      // Predicated region
      $region9: #{tpu_custom_call.1} parent=5 // pred_check
        _
      $region10: #{tpu_custom_call.1} parent=5 // pred_check_branch
        %147 = sbr.rel (%p144) target = $region12
      $region11: #{tpu_custom_call.1} parent=5 // pred_region
        %s148 = ssub.s32 %s18, 1
      $region12: #{tpu_custom_call.1} parent=5 // pred_fallthru
        _
      %p149 = scmp.lt.s32.totalorder %s18, 4
      // Predicated region
      $region13: #{tpu_custom_call.1} parent=5 // pred_check
        %p150 = pneg %p149
      $region14: #{tpu_custom_call.1} parent=5 // pred_check_branch
        %152 = sbr.rel (%p150) target = $region16
      $region15: #{tpu_custom_call.1} parent=5 // pred_region
        // Predicated region
        $region17: #{tpu_custom_call.1} parent=15 // pred_check
          %p153 = pneg %p50
        $region18: #{tpu_custom_call.1} parent=15 // pred_check_branch
          %155 = sbr.rel (%p153) target = $region20
        $region19: #{tpu_custom_call.1} parent=15 // pred_region
          %s156 = sand.u32 %s40, 1
          %s157 = scalar_lea.sflag [#allocation4], %s156
          %s158 = sand.u32 %s40, 1
          %s159 = smul.addr %s158, 8
          %s160 = scalar_lea.vmem [#allocation3], %s159
          %s161 = smul.u32 2, %s25
          %163 = vsyncadd %s157, 0
          %s164 = smul.addr %s161, 4
          %s165 = scalar_lea.hbm %s0, %s164
          %s166 = sshll.u32 %s165, 4
          %s167 = int_to_ptr.hbm [resolvable:$true] %s166
          %s168 = sshll.u32 %s160, 4
          %s169 = int_to_ptr.vmem [resolvable:$true] %s168
          %174 = dma.hbm_to_vmem [thread:$0]  %s167, 128, %s169, %s157, 64, 64, 4
        $region20: #{tpu_custom_call.1} parent=15 // pred_fallthru
          _
        // Predicated region
        $region21: #{tpu_custom_call.1} parent=15 // pred_check
          %p175 = pneg %p76
        $region22: #{tpu_custom_call.1} parent=15 // pred_check_branch
          %177 = sbr.rel (%p175) target = $region24
        $region23: #{tpu_custom_call.1} parent=15 // pred_region
          %s178 = sand.u32 %s18, 1
          %s179 = scalar_lea.sflag [#allocation7], %s178
          %s180 = sand.u32 %s66, 1
          %s181 = smul.addr %s180, 256
          %s182 = scalar_lea.vmem [#allocation6], %s181
          %s183 = smul.u32 4, %s26
          %185 = vsyncadd %s179, 0
          %s186 = smul.addr %s183, 4
          %s187 = scalar_lea.hbm %s1, %s186
          %s188 = sshll.u32 %s187, 4
          %s189 = int_to_ptr.hbm [resolvable:$true] %s188
          %s190 = sshll.u32 %s182, 4
          %s191 = int_to_ptr.vmem [resolvable:$true] %s190
          %196 = dma.hbm_to_vmem [thread:$0]  %s189, 4096, %s191, %s179, 512, 256, 16
        $region24: #{tpu_custom_call.1} parent=15 // pred_fallthru
          _
        // Predicated region
        $region25: #{tpu_custom_call.1} parent=15 // pred_check
          %p197 = pneg %p102
        $region26: #{tpu_custom_call.1} parent=15 // pred_check_branch
          %199 = sbr.rel (%p197) target = $region28
        $region27: #{tpu_custom_call.1} parent=15 // pred_region
          %s200 = sand.u32 %s18, 1
          %s201 = scalar_lea.sflag [#allocation7], %s200
          %s202 = sand.u32 %s92, 1
          %s203 = smul.addr %s202, 128
          %s204 = scalar_lea.vmem [#allocation8], %s203
          %s205 = smul.u32 32, %s26
          %207 = vsyncadd %s201, 0
          %s208 = smul.addr %s205, 4
          %s209 = scalar_lea.hbm %s2, %s208
          %s210 = sshll.u32 %s209, 4
          %s211 = int_to_ptr.hbm [resolvable:$true] %s210
          %s212 = sshll.u32 %s204, 4
          %s213 = int_to_ptr.vmem [resolvable:$true] %s212
          %218 = dma.hbm_to_vmem [thread:$0]  %s211, 2048, %s213, %s201, 64, 64, 4
        $region28: #{tpu_custom_call.1} parent=15 // pred_fallthru
          _
      $region16: #{tpu_custom_call.1} parent=5 // pred_fallthru
        _
      %p219 = scmp.le.s32.totalorder 1, %s18
      %p220 = scmp.lt.s32.totalorder %s18, 5
      %p221 = pnand %p219, %p220
      %p222 = pneg %p221
      // Predicated region
      $region29: #{tpu_custom_call.1} parent=5 // pred_check
        _
      $region30: #{tpu_custom_call.1} parent=5 // pred_check_branch
        %224 = sbr.rel (%p221) target = $region32
      $region31: #{tpu_custom_call.1} parent=5 // pred_region
        %s225 = ssub.s32 %s18, 1
        %s226 = sand.u32 %s43, 1
        %s227 = scalar_lea.sflag [#allocation4], %s226
        %s228 = sand.u32 %s43, 1
        %s229 = smul.addr %s228, 8
        %s230 = scalar_lea.vmem [#allocation3], %s229
        // Predicated region
        $region33: #{tpu_custom_call.1} parent=31 // pred_check
          %p231 = pneg %p56
        $region34: #{tpu_custom_call.1} parent=31 // pred_check_branch
          %233 = sbr.rel (%p231) target = $region36
        $region35: #{tpu_custom_call.1} parent=31 // pred_region
          %235 = dma.done %s227, 128
        $region36: #{tpu_custom_call.1} parent=31 // pred_fallthru
          _
        %s236 = sand.u32 %s23, 1
        %s237 = scalar_lea.sflag [#allocation7], %s236
        %s238 = sand.u32 %s69, 1
        %s239 = smul.addr %s238, 256
        %s240 = scalar_lea.vmem [#allocation6], %s239
        // Predicated region
        $region37: #{tpu_custom_call.1} parent=31 // pred_check
          %p241 = pneg %p82
        $region38: #{tpu_custom_call.1} parent=31 // pred_check_branch
          %243 = sbr.rel (%p241) target = $region40
        $region39: #{tpu_custom_call.1} parent=31 // pred_region
          %245 = dma.done %s237, 4096
        $region40: #{tpu_custom_call.1} parent=31 // pred_fallthru
          _
        %s246 = sand.u32 %s23, 1
        %s247 = scalar_lea.sflag [#allocation7], %s246
        %s248 = sand.u32 %s95, 1
        %s249 = smul.addr %s248, 128
        %s250 = scalar_lea.vmem [#allocation8], %s249
        // Predicated region
        $region41: #{tpu_custom_call.1} parent=31 // pred_check
          %p251 = pneg %p108
        $region42: #{tpu_custom_call.1} parent=31 // pred_check_branch
          %253 = sbr.rel (%p251) target = $region44
        $region43: #{tpu_custom_call.1} parent=31 // pred_region
          %255 = dma.done %s247, 2048
        $region44: #{tpu_custom_call.1} parent=31 // pred_fallthru
          _
        %s256 = sand.u32 %s43, 1
        %s257 = scalar_lea.sflag [#allocation4], %s256
        %s258 = sand.u32 %s43, 1
        %s259 = smul.addr %s258, 8
        %s260 = scalar_lea.vmem [#allocation3], %s259
        %p261 = pneg %p56
        %p262 = pneg %p53
        %s263 = sand.u32 %s23, 1
        %s264 = scalar_lea.sflag [#allocation7], %s263
        %s265 = sand.u32 %s69, 1
        %s266 = smul.addr %s265, 256
        %s267 = scalar_lea.vmem [#allocation6], %s266
        %p268 = pneg %p82
        %p269 = pneg %p79
        %s270 = sand.u32 %s23, 1
        %s271 = scalar_lea.sflag [#allocation7], %s270
        %s272 = sand.u32 %s95, 1
        %s273 = smul.addr %s272, 128
        %s274 = scalar_lea.vmem [#allocation8], %s273
        %p275 = pneg %p108
        %p276 = pneg %p105
        %p277 = pneg %p134
        %p278 = pneg %p131
        %s279 = sand.u32 %s121, 1
        %s280 = scalar_lea.sflag [#allocation5], %s279
        %s281 = sand.u32 %s121, 1
        %s282 = smul.addr %s281, 8
        %s283 = scalar_lea.vmem [#allocation9], %s282
        %s284 = smul.u32 2, %s27
        %s285 = smul.u32 4, %s28
        %s286 = smul.u32 32, %s28
        %s287 = smul.u32 2, %s27
        %p288 = scmp.eq.s32.totalorder %s28, 0
        // Predicated region
        $region45: #{tpu_custom_call.1} parent=31 // pred_check
          %p289 = pneg %p288
        $region46: #{tpu_custom_call.1} parent=31 // pred_check_branch
          %291 = sbr.rel (%p289) target = $region48
        $region47: #{tpu_custom_call.1} parent=31 // pred_region
          %292 = vst [vmem:[#allocation2] sm:$0xff] 0.0
          %293 = vst [vmem:[#allocation2 + $0x8] sm:$0xff] 0.0
        $region48: #{tpu_custom_call.1} parent=31 // pred_fallthru
          _
        %v294 = vld [vmem:[%s230] sm:$0xf]
        %v295 = vld [vmem:[%s230 + $0x4] sm:$0xf]
        %v296 = vld [vmem:[%s240] sm:$0xff]
        %v297 = vld [vmem:[%s240 + $0x8] sm:$0xff]
        %v298 = vld [vmem:[%s240 + $0x10] sm:$0xff]
        %v299 = vld [vmem:[%s240 + $0x18] sm:$0xff]
        %v300 = vld [vmem:[%s240 + $0x20] sm:$0xff]
        %v301 = vld [vmem:[%s240 + $0x28] sm:$0xff]
        %v302 = vld [vmem:[%s240 + $0x30] sm:$0xff]
        %v303 = vld [vmem:[%s240 + $0x38] sm:$0xff]
        %v304 = vld [vmem:[%s240 + $0x40] sm:$0xff]
        %v305 = vld [vmem:[%s240 + $0x48] sm:$0xff]
        %v306 = vld [vmem:[%s240 + $0x50] sm:$0xff]
        %v307 = vld [vmem:[%s240 + $0x58] sm:$0xff]
        %v308 = vld [vmem:[%s240 + $0x60] sm:$0xff]
        %v309 = vld [vmem:[%s240 + $0x68] sm:$0xff]
        %v310 = vld [vmem:[%s240 + $0x70] sm:$0xff]
        %v311 = vld [vmem:[%s240 + $0x78] sm:$0xff]
        %v312 = vld [vmem:[%s240 + $0x80] sm:$0xff]
        %v313 = vld [vmem:[%s240 + $0x88] sm:$0xff]
        %v314 = vld [vmem:[%s240 + $0x90] sm:$0xff]
        %v315 = vld [vmem:[%s240 + $0x98] sm:$0xff]
        %v316 = vld [vmem:[%s240 + $0xa0] sm:$0xff]
        %v317 = vld [vmem:[%s240 + $0xa8] sm:$0xff]
        %v318 = vld [vmem:[%s240 + $0xb0] sm:$0xff]
        %v319 = vld [vmem:[%s240 + $0xb8] sm:$0xff]
        %v320 = vld [vmem:[%s240 + $0xc0] sm:$0xff]
        %v321 = vld [vmem:[%s240 + $0xc8] sm:$0xff]
        %v322 = vld [vmem:[%s240 + $0xd0] sm:$0xff]
        %v323 = vld [vmem:[%s240 + $0xd8] sm:$0xff]
        %v324 = vld [vmem:[%s240 + $0xe0] sm:$0xff]
        %v325 = vld [vmem:[%s240 + $0xe8] sm:$0xff]
        %v326 = vld [vmem:[%s240 + $0xf0] sm:$0xff]
        %v327 = vld [vmem:[%s240 + $0xf8] sm:$0xff]
        %v330 = vunpack.c.l.b16 %v294
        %v331 = vunpack.c.l.b16 %v295
        %v332 = vpack.c.b16 %v331, %v330
        %v366 = vunpack.c.l.b16 %v296
        %v367 = vunpack.c.h.b16 %v296
        %v368 = vunpack.c.l.b16 %v297
        %v369 = vunpack.c.h.b16 %v297
        %v370 = vunpack.c.l.b16 %v298
        %v371 = vunpack.c.h.b16 %v298
        %v372 = vunpack.c.l.b16 %v299
        %v373 = vunpack.c.h.b16 %v299
        %v374 = vunpack.c.l.b16 %v300
        %v375 = vunpack.c.h.b16 %v300
        %v376 = vunpack.c.l.b16 %v301
        %v377 = vunpack.c.h.b16 %v301
        %v378 = vunpack.c.l.b16 %v302
        %v379 = vunpack.c.h.b16 %v302
        %v380 = vunpack.c.l.b16 %v303
        %v381 = vunpack.c.h.b16 %v303
        %v382 = vunpack.c.l.b16 %v304
        %v383 = vunpack.c.h.b16 %v304
        %v384 = vunpack.c.l.b16 %v305
        %v385 = vunpack.c.h.b16 %v305
        %v386 = vunpack.c.l.b16 %v306
        %v387 = vunpack.c.h.b16 %v306
        %v388 = vunpack.c.l.b16 %v307
        %v389 = vunpack.c.h.b16 %v307
        %v390 = vunpack.c.l.b16 %v308
        %v391 = vunpack.c.h.b16 %v308
        %v392 = vunpack.c.l.b16 %v309
        %v393 = vunpack.c.h.b16 %v309
        %v394 = vunpack.c.l.b16 %v310
        %v395 = vunpack.c.h.b16 %v310
        %v396 = vunpack.c.l.b16 %v311
        %v397 = vunpack.c.h.b16 %v311
        %v398 = vunpack.c.l.b16 %v312
        %v399 = vunpack.c.h.b16 %v312
        %v400 = vunpack.c.l.b16 %v313
        %v401 = vunpack.c.h.b16 %v313
        %v402 = vunpack.c.l.b16 %v314
        %v403 = vunpack.c.h.b16 %v314
        %v404 = vunpack.c.l.b16 %v315
        %v405 = vunpack.c.h.b16 %v315
        %v406 = vunpack.c.l.b16 %v316
        %v407 = vunpack.c.h.b16 %v316
        %v408 = vunpack.c.l.b16 %v317
        %v409 = vunpack.c.h.b16 %v317
        %v410 = vunpack.c.l.b16 %v318
        %v411 = vunpack.c.h.b16 %v318
        %v412 = vunpack.c.l.b16 %v319
        %v413 = vunpack.c.h.b16 %v319
        %v414 = vunpack.c.l.b16 %v320
        %v415 = vunpack.c.h.b16 %v320
        %v416 = vunpack.c.l.b16 %v321
        %v417 = vunpack.c.h.b16 %v321
        %v418 = vunpack.c.l.b16 %v322
        %v419 = vunpack.c.h.b16 %v322
        %v420 = vunpack.c.l.b16 %v323
        %v421 = vunpack.c.h.b16 %v323
        %v422 = vunpack.c.l.b16 %v324
        %v423 = vunpack.c.h.b16 %v324
        %v424 = vunpack.c.l.b16 %v325
        %v425 = vunpack.c.h.b16 %v325
        %v426 = vunpack.c.l.b16 %v326
        %v427 = vunpack.c.h.b16 %v326
        %v428 = vunpack.c.l.b16 %v327
        %v429 = vunpack.c.h.b16 %v327
        %v430 = vpack.c.b16 %v370, %v366
        %v431 = vpack.c.b16 %v371, %v367
        %v432 = vpack.c.b16 %v372, %v368
        %v433 = vpack.c.b16 %v373, %v369
        %v434 = vpack.c.b16 %v378, %v374
        %v435 = vpack.c.b16 %v379, %v375
        %v436 = vpack.c.b16 %v380, %v376
        %v437 = vpack.c.b16 %v381, %v377
        %v438 = vpack.c.b16 %v386, %v382
        %v439 = vpack.c.b16 %v387, %v383
        %v440 = vpack.c.b16 %v388, %v384
        %v441 = vpack.c.b16 %v389, %v385
        %v442 = vpack.c.b16 %v394, %v390
        %v443 = vpack.c.b16 %v395, %v391
        %v444 = vpack.c.b16 %v396, %v392
        %v445 = vpack.c.b16 %v397, %v393
        %v446 = vpack.c.b16 %v402, %v398
        %v447 = vpack.c.b16 %v403, %v399
        %v448 = vpack.c.b16 %v404, %v400
        %v449 = vpack.c.b16 %v405, %v401
        %v450 = vpack.c.b16 %v410, %v406
        %v451 = vpack.c.b16 %v411, %v407
        %v452 = vpack.c.b16 %v412, %v408
        %v453 = vpack.c.b16 %v413, %v409
        %v454 = vpack.c.b16 %v418, %v414
        %v455 = vpack.c.b16 %v419, %v415
        %v456 = vpack.c.b16 %v420, %v416
        %v457 = vpack.c.b16 %v421, %v417
        %v458 = vpack.c.b16 %v426, %v422
        %v459 = vpack.c.b16 %v427, %v423
        %v460 = vpack.c.b16 %v428, %v424
        %v461 = vpack.c.b16 %v429, %v425
        %494 = vmatpush.bf16.msra.mxu0 %v458
        %495 = vmatpush.bf16.msra.mxu0 %v454
        %496 = vmatpush.bf16.msra.mxu0 %v450
        %497 = vmatpush.bf16.msra.mxu0 %v446
        %498 = vmatpush.bf16.msra.mxu0 %v442
        %499 = vmatpush.bf16.msra.mxu0 %v438
        %500 = vmatpush.bf16.msra.mxu0 %v434
        %501 = vmatpush.bf16.msra.mxu0 %v430
        %502 = vmatmul.bf16.gmra.mxu0 %v332
        %v503 = vpop.f32.mrf.mxu0
        %v504 = vadd.f32 0.0, %v503
        %v505 = vpop.f32.mrf.mxu0
        %v506 = vadd.f32 0.0, %v505
        %507 = vdwg.mxu0
        %508 = vmatpush.bf16.msra.mxu0 %v459
        %509 = vmatpush.bf16.msra.mxu0 %v455
        %510 = vmatpush.bf16.msra.mxu0 %v451
        %511 = vmatpush.bf16.msra.mxu0 %v447
        %512 = vmatpush.bf16.msra.mxu0 %v443
        %513 = vmatpush.bf16.msra.mxu0 %v439
        %514 = vmatpush.bf16.msra.mxu0 %v435
        %515 = vmatpush.bf16.msra.mxu0 %v431
        %516 = vmatmul.bf16.gmra.mxu0 %v332
        %v517 = vpop.f32.mrf.mxu0
        %v518 = vadd.f32 0.0, %v517
        %v519 = vpop.f32.mrf.mxu0
        %v520 = vadd.f32 0.0, %v519
        %521 = vdwg.mxu0
        %522 = vmatpush.bf16.msra.mxu0 %v460
        %523 = vmatpush.bf16.msra.mxu0 %v456
        %524 = vmatpush.bf16.msra.mxu0 %v452
        %525 = vmatpush.bf16.msra.mxu0 %v448
        %526 = vmatpush.bf16.msra.mxu0 %v444
        %527 = vmatpush.bf16.msra.mxu0 %v440
        %528 = vmatpush.bf16.msra.mxu0 %v436
        %529 = vmatpush.bf16.msra.mxu0 %v432
        %530 = vmatmul.bf16.gmra.mxu0 %v332
        %v531 = vpop.f32.mrf.mxu0
        %v532 = vadd.f32 0.0, %v531
        %v533 = vpop.f32.mrf.mxu0
        %v534 = vadd.f32 0.0, %v533
        %535 = vdwg.mxu0
        %536 = vmatpush.bf16.msra.mxu0 %v461
        %537 = vmatpush.bf16.msra.mxu0 %v457
        %538 = vmatpush.bf16.msra.mxu0 %v453
        %539 = vmatpush.bf16.msra.mxu0 %v449
        %540 = vmatpush.bf16.msra.mxu0 %v445
        %541 = vmatpush.bf16.msra.mxu0 %v441
        %542 = vmatpush.bf16.msra.mxu0 %v437
        %543 = vmatpush.bf16.msra.mxu0 %v433
        %544 = vmatmul.bf16.gmra.mxu0 %v332
        %v545 = vpop.f32.mrf.mxu0
        %v546 = vadd.f32 0.0, %v545
        %v547 = vpop.f32.mrf.mxu0
        %v548 = vadd.f32 0.0, %v547
        %549 = vdwg.mxu0
        %v550 = vxor.u32 %v504, 2147483648
        %v551 = vxor.u32 %v518, 2147483648
        %v552 = vxor.u32 %v506, 2147483648
        %v553 = vxor.u32 %v520, 2147483648
        %v554 = vmul.f32 %v550, 1.442695
        %v555 = vpow.pop %v554
        %v556 = vmul.f32 %v551, 1.442695
        %v557 = vpow.pop %v556
        %v558 = vmul.f32 %v552, 1.442695
        %v559 = vpow.pop %v558
        %v560 = vmul.f32 %v553, 1.442695
        %v561 = vpow.pop %v560
        %v562 = vadd.f32 %v555, 1.0
        %v563 = vadd.f32 %v557, 1.0
        %v564 = vadd.f32 %v559, 1.0
        %v565 = vadd.f32 %v561, 1.0
        %v566 = vrcp.pop %v562
        %v567 = vmul.f32 %v562, %v566
        %v568 = vsub.f32 1.0, %v567
        %v569 = vmul.f32 %v566, %v568
        %v570 = vadd.f32 %v566, %v569
        %vm571 = vweird.f32 %v562
        %vm572 = vweird.f32 %v566
        %vm573 = vmor %vm571, %vm572
        %v574 = vsel %vm573, %v566, %v570
        %v575 = vand.u32 2147483647, %v562
        %vm576 = vcmp.eq.f32.partialorder %v575, 8.507059e+37
        %v577 = vand.u32 %v562, 2147483648
        %v578 = vor.u32 1.1754944e-38, %v577
        %v579 = vsel %vm576, %v578, %v574
        %v580 = vmul.f32 1.0, %v579
        %v581 = vrcp.pop %v563
        %v582 = vmul.f32 %v563, %v581
        %v583 = vsub.f32 1.0, %v582
        %v584 = vmul.f32 %v581, %v583
        %v585 = vadd.f32 %v581, %v584
        %vm586 = vweird.f32 %v563
        %vm587 = vweird.f32 %v581
        %vm588 = vmor %vm586, %vm587
        %v589 = vsel %vm588, %v581, %v585
        %v590 = vand.u32 2147483647, %v563
        %vm591 = vcmp.eq.f32.partialorder %v590, 8.507059e+37
        %v592 = vand.u32 %v563, 2147483648
        %v593 = vor.u32 1.1754944e-38, %v592
        %v594 = vsel %vm591, %v593, %v589
        %v595 = vmul.f32 1.0, %v594
        %v596 = vrcp.pop %v564
        %v597 = vmul.f32 %v564, %v596
        %v598 = vsub.f32 1.0, %v597
        %v599 = vmul.f32 %v596, %v598
        %v600 = vadd.f32 %v596, %v599
        %vm601 = vweird.f32 %v564
        %vm602 = vweird.f32 %v596
        %vm603 = vmor %vm601, %vm602
        %v604 = vsel %vm603, %v596, %v600
        %v605 = vand.u32 2147483647, %v564
        %vm606 = vcmp.eq.f32.partialorder %v605, 8.507059e+37
        %v607 = vand.u32 %v564, 2147483648
        %v608 = vor.u32 1.1754944e-38, %v607
        %v609 = vsel %vm606, %v608, %v604
        %v610 = vmul.f32 1.0, %v609
        %v611 = vrcp.pop %v565
        %v612 = vmul.f32 %v565, %v611
        %v613 = vsub.f32 1.0, %v612
        %v614 = vmul.f32 %v611, %v613
        %v615 = vadd.f32 %v611, %v614
        %vm616 = vweird.f32 %v565
        %vm617 = vweird.f32 %v611
        %vm618 = vmor %vm616, %vm617
        %v619 = vsel %vm618, %v611, %v615
        %v620 = vand.u32 2147483647, %v565
        %vm621 = vcmp.eq.f32.partialorder %v620, 8.507059e+37
        %v622 = vand.u32 %v565, 2147483648
        %v623 = vor.u32 1.1754944e-38, %v622
        %v624 = vsel %vm621, %v623, %v619
        %v625 = vmul.f32 1.0, %v624
        %v626 = vmul.f32 %v504, %v580
        %v627 = vmul.f32 %v518, %v595
        %v628 = vmul.f32 %v506, %v610
        %v629 = vmul.f32 %v520, %v625
        %v630 = vmul.f32 %v626, %v532
        %v631 = vmul.f32 %v627, %v546
        %v632 = vmul.f32 %v628, %v534
        %v633 = vmul.f32 %v629, %v548
        %v634 = vld [vmem:[#allocation2] sm:$0xff]
        %v635 = vld [vmem:[#allocation2 + $0x8] sm:$0xff]
        %v636 = vpack.c.bf16 %v632, %v630
        %v637 = vpack.c.bf16 %v633, %v631
        %v638 = vld [vmem:[%s250] sm:$0xf]
        %v639 = vld [vmem:[%s250 + $0x4] sm:$0xf]
        %v640 = vld [vmem:[%s250 + $0x8] sm:$0xf]
        %v641 = vld [vmem:[%s250 + $0xc] sm:$0xf]
        %v642 = vld [vmem:[%s250 + $0x10] sm:$0xf]
        %v643 = vld [vmem:[%s250 + $0x14] sm:$0xf]
        %v644 = vld [vmem:[%s250 + $0x18] sm:$0xf]
        %v645 = vld [vmem:[%s250 + $0x1c] sm:$0xf]
        %v646 = vld [vmem:[%s250 + $0x20] sm:$0xf]
        %v647 = vld [vmem:[%s250 + $0x24] sm:$0xf]
        %v648 = vld [vmem:[%s250 + $0x28] sm:$0xf]
        %v649 = vld [vmem:[%s250 + $0x2c] sm:$0xf]
        %v650 = vld [vmem:[%s250 + $0x30] sm:$0xf]
        %v651 = vld [vmem:[%s250 + $0x34] sm:$0xf]
        %v652 = vld [vmem:[%s250 + $0x38] sm:$0xf]
        %v653 = vld [vmem:[%s250 + $0x3c] sm:$0xf]
        %v654 = vld [vmem:[%s250 + $0x40] sm:$0xf]
        %v655 = vld [vmem:[%s250 + $0x44] sm:$0xf]
        %v656 = vld [vmem:[%s250 + $0x48] sm:$0xf]
        %v657 = vld [vmem:[%s250 + $0x4c] sm:$0xf]
        %v658 = vld [vmem:[%s250 + $0x50] sm:$0xf]
        %v659 = vld [vmem:[%s250 + $0x54] sm:$0xf]
        %v660 = vld [vmem:[%s250 + $0x58] sm:$0xf]
        %v661 = vld [vmem:[%s250 + $0x5c] sm:$0xf]
        %v662 = vld [vmem:[%s250 + $0x60] sm:$0xf]
        %v663 = vld [vmem:[%s250 + $0x64] sm:$0xf]
        %v664 = vld [vmem:[%s250 + $0x68] sm:$0xf]
        %v665 = vld [vmem:[%s250 + $0x6c] sm:$0xf]
        %v666 = vld [vmem:[%s250 + $0x70] sm:$0xf]
        %v667 = vld [vmem:[%s250 + $0x74] sm:$0xf]
        %v668 = vld [vmem:[%s250 + $0x78] sm:$0xf]
        %v669 = vld [vmem:[%s250 + $0x7c] sm:$0xf]
        %v702 = vunpack.c.l.b16 %v638
        %v703 = vunpack.c.l.b16 %v639
        %v704 = vunpack.c.l.b16 %v640
        %v705 = vunpack.c.l.b16 %v641
        %v706 = vunpack.c.l.b16 %v642
        %v707 = vunpack.c.l.b16 %v643
        %v708 = vunpack.c.l.b16 %v644
        %v709 = vunpack.c.l.b16 %v645
        %v710 = vunpack.c.l.b16 %v646
        %v711 = vunpack.c.l.b16 %v647
        %v712 = vunpack.c.l.b16 %v648
        %v713 = vunpack.c.l.b16 %v649
        %v714 = vunpack.c.l.b16 %v650
        %v715 = vunpack.c.l.b16 %v651
        %v716 = vunpack.c.l.b16 %v652
        %v717 = vunpack.c.l.b16 %v653
        %v718 = vunpack.c.l.b16 %v654
        %v719 = vunpack.c.l.b16 %v655
        %v720 = vunpack.c.l.b16 %v656
        %v721 = vunpack.c.l.b16 %v657
        %v722 = vunpack.c.l.b16 %v658
        %v723 = vunpack.c.l.b16 %v659
        %v724 = vunpack.c.l.b16 %v660
        %v725 = vunpack.c.l.b16 %v661
        %v726 = vunpack.c.l.b16 %v662
        %v727 = vunpack.c.l.b16 %v663
        %v728 = vunpack.c.l.b16 %v664
        %v729 = vunpack.c.l.b16 %v665
        %v730 = vunpack.c.l.b16 %v666
        %v731 = vunpack.c.l.b16 %v667
        %v732 = vunpack.c.l.b16 %v668
        %v733 = vunpack.c.l.b16 %v669
        %v734 = vpack.c.b16 %v703, %v702
        %v735 = vpack.c.b16 %v705, %v704
        %v736 = vpack.c.b16 %v707, %v706
        %v737 = vpack.c.b16 %v709, %v708
        %v738 = vpack.c.b16 %v711, %v710
        %v739 = vpack.c.b16 %v713, %v712
        %v740 = vpack.c.b16 %v715, %v714
        %v741 = vpack.c.b16 %v717, %v716
        %v742 = vpack.c.b16 %v719, %v718
        %v743 = vpack.c.b16 %v721, %v720
        %v744 = vpack.c.b16 %v723, %v722
        %v745 = vpack.c.b16 %v725, %v724
        %v746 = vpack.c.b16 %v727, %v726
        %v747 = vpack.c.b16 %v729, %v728
        %v748 = vpack.c.b16 %v731, %v730
        %v749 = vpack.c.b16 %v733, %v732
        %766 = vmatpush.bf16.msra.mxu0 %v741
        %767 = vmatpush.bf16.msra.mxu0 %v740
        %768 = vmatpush.bf16.msra.mxu0 %v739
        %769 = vmatpush.bf16.msra.mxu0 %v738
        %770 = vmatpush.bf16.msra.mxu0 %v737
        %771 = vmatpush.bf16.msra.mxu0 %v736
        %772 = vmatpush.bf16.msra.mxu0 %v735
        %773 = vmatpush.bf16.msra.mxu0 %v734
        %774 = vmatmul.bf16.gmra.mxu0 %v636
        %v775 = vpop.f32.mrf.mxu0
        %v776 = vadd.f32 0.0, %v775
        %v777 = vpop.f32.mrf.mxu0
        %v778 = vadd.f32 0.0, %v777
        %779 = vdwg.mxu0
        %780 = vmatpush.bf16.msra.mxu0 %v749
        %781 = vmatpush.bf16.msra.mxu0 %v748
        %782 = vmatpush.bf16.msra.mxu0 %v747
        %783 = vmatpush.bf16.msra.mxu0 %v746
        %784 = vmatpush.bf16.msra.mxu0 %v745
        %785 = vmatpush.bf16.msra.mxu0 %v744
        %786 = vmatpush.bf16.msra.mxu0 %v743
        %787 = vmatpush.bf16.msra.mxu0 %v742
        %788 = vmatmul.bf16.gmra.mxu0 %v637
        %v789 = vpop.f32.mrf.mxu0
        %v790 = vadd.f32 %v776, %v789
        %v791 = vpop.f32.mrf.mxu0
        %v792 = vadd.f32 %v778, %v791
        %793 = vdwg.mxu0
        %v794 = vadd.f32 %v634, %v790
        %v795 = vadd.f32 %v635, %v792
        %796 = vst [vmem:[#allocation2] sm:$0xff] %v794
        %797 = vst [vmem:[#allocation2 + $0x8] sm:$0xff] %v795
        %p798 = scmp.eq.s32.totalorder %s28, 1
        // Predicated region
        $region49: #{tpu_custom_call.1} parent=31 // pred_check
          %p799 = pneg %p798
        $region50: #{tpu_custom_call.1} parent=31 // pred_check_branch
          %801 = sbr.rel (%p799) target = $region52
        $region51: #{tpu_custom_call.1} parent=31 // pred_region
          %v802 = vld [vmem:[#allocation2] sm:$0xff]
          %v803 = vld [vmem:[#allocation2 + $0x8] sm:$0xff]
          %v804 = vpack.c.bf16 %v802, %v802
          %v805 = vpack.c.bf16 %v803, %v803
          %806 = vst [vmem:[%s283] sm:$0xf] %v804
          %807 = vst [vmem:[%s283 + $0x4] sm:$0xf] %v805
        $region52: #{tpu_custom_call.1} parent=31 // pred_fallthru
          _
        %s808 = sand.u32 %s121, 1
        %s809 = scalar_lea.sflag [#allocation5], %s808
        %s810 = sand.u32 %s121, 1
        %s811 = smul.addr %s810, 8
        %s812 = scalar_lea.vmem [#allocation9], %s811
        // Predicated region
        $region53: #{tpu_custom_call.1} parent=31 // pred_check
          %p813 = pneg %p131
        $region54: #{tpu_custom_call.1} parent=31 // pred_check_branch
          %815 = sbr.rel (%p813) target = $region56
        $region55: #{tpu_custom_call.1} parent=31 // pred_region
          %s816 = smul.u32 2, %s27
          %818 = vsyncadd %s809, 0
          %s819 = smul.addr %s816, 4
          %s820 = scalar_lea.hbm %s3, %s819
          %s821 = sshll.u32 %s812, 4
          %s822 = int_to_ptr.vmem [resolvable:$true] %s821
          %s823 = sshll.u32 %s820, 4
          %s824 = int_to_ptr.hbm [resolvable:$true] %s823
          %829 = dma.vmem_to_hbm [thread:$0]  %s822, 128, %s824, %s809, 64, 64, 4
        $region56: #{tpu_custom_call.1} parent=31 // pred_fallthru
          _
      $region32: #{tpu_custom_call.1} parent=5 // pred_fallthru
        _
      %p830 = scmp.le.s32.totalorder 2, %s18
      // Predicated region
      $region57: #{tpu_custom_call.1} parent=5 // pred_check
        %p831 = pneg %p830
      $region58: #{tpu_custom_call.1} parent=5 // pred_check_branch
        %833 = sbr.rel (%p831) target = $region60
      $region59: #{tpu_custom_call.1} parent=5 // pred_region
        %s834 = ssub.s32 %s18, 2
        // Predicated region
        $region61: #{tpu_custom_call.1} parent=59 // pred_check
          %p835 = pneg %p137
        $region62: #{tpu_custom_call.1} parent=59 // pred_check_branch
          %837 = sbr.rel (%p835) target = $region64
        $region63: #{tpu_custom_call.1} parent=59 // pred_region
          %s838 = sand.u32 %s122, 1
          %s839 = scalar_lea.sflag [#allocation5], %s838
          %s840 = sand.u32 %s122, 1
          %s841 = smul.addr %s840, 8
          %s842 = scalar_lea.vmem [#allocation9], %s841
          %844 = dma.done %s839, 128
        $region64: #{tpu_custom_call.1} parent=59 // pred_fallthru
          _
      $region60: #{tpu_custom_call.1} parent=5 // pred_fallthru
        _
    $region6: #{tpu_custom_call.1} parent=1 // loop_footer
      %s22 = sadd.s32 1, %s18
    $region7: #{tpu_custom_call.1} parent=1 // loop_footer_branch
      %17 = sbr.rel target = $region3
    $region8: #{tpu_custom_call.1} parent=1 // loop_exit
      _
    %845 = vsyncpa [#allocation4], 1
    %s846 = scalar_lea.sflag [#allocation4], 1
    %847 = vsyncpa %s846, 1
    %848 = vsyncpa [#allocation7], 1
    %s849 = scalar_lea.sflag [#allocation7], 1
    %850 = vsyncpa %s849, 1
    %851 = vsyncpa [#allocation5], 1
    %s852 = scalar_lea.sflag [#allocation5], 1
    %853 = vsyncpa %s852, 1

</llo_original>
